<compile_context>
chip_gen: v6e
topology: v6e:2x2x1
jax: 0.10.0
libtpu: 0.0.40
codegen_flags: <defaults>
</compile_context>

<pallas_src>
import functools

import jax
import jax.numpy as jnp
from jax.experimental import pallas as pl
from jax.experimental.pallas import tpu as pltpu


def _round_up(x, m):
    return (x + m - 1) // m * m


def _classifier_kernel(x_ref, w1_ref, b1_ref, w2_ref, b2_ref, w3_ref, b3_ref,
                       o_ref, acc_ref, *, inv_s, num_bins):
    s = pl.program_id(1)

    @pl.when(s == 0)
    def _():
        acc_ref[...] = jnp.zeros_like(acc_ref)

    # Streamed sum over the sequence axis (per-tile upcast keeps bf16 inputs
    # cheap on HBM while accumulating in f32).
    x = x_ref[...].astype(jnp.float32)              # (TB, TS, D)
    acc_ref[...] += jnp.sum(x, axis=1)              # (TB, D)

    @pl.when(s == pl.num_programs(1) - 1)
    def _():
        xm = acc_ref[...] * inv_s                   # true mean (divide by real S)

        h = jnp.dot(xm, w1_ref[...], preferred_element_type=jnp.float32)
        h = jnp.maximum(h + b1_ref[...], 0.0)       # fc11 + ReLU

        h = jnp.dot(h, w2_ref[...], preferred_element_type=jnp.float32)
        h = jnp.maximum(h + b2_ref[...], 0.0)       # fc12 + ReLU

        logits = jnp.dot(h, w3_ref[...], preferred_element_type=jnp.float32)
        logits = logits + b3_ref[...]               # (TB, NB_pad)

        # Mask padded bin columns so they do not contribute to the softmax.
        col = jax.lax.broadcasted_iota(jnp.int32, logits.shape, 1)
        logits = jnp.where(col < num_bins, logits, -1e30)

        # Numerically stable LogSoftmax(dim=-1).
        m = jnp.max(logits, axis=-1, keepdims=True)
        shifted = logits - m
        lse = jnp.log(jnp.sum(jnp.exp(shifted), axis=-1, keepdims=True))
        o_ref[...] = (shifted - lse).astype(o_ref.dtype)


def classifier_forward(x, params):
    """x: (B, S, D) float32/bfloat16; params: dict of w1,b1,w2,b2,w3,b3.

    Weights are (in_features, out_features); biases are (1, out_features)
    (i.e. the transpose of PyTorch's Linear.weight), so the kernel computes
    x @ W + b == PyTorch's x @ W_pt.T + b.
    """
    B, S, D = x.shape
    w1, b1 = params["w1"], params["b1"]  # (D, 256),   (1, 256)
    w2, b2 = params["w2"], params["b2"]  # (256, 128), (1, 128)
    w3, b3 = params["w3"], params["b3"]  # (128, NB),  (1, NB)
    num_bins = w3.shape[1]

    # ---- tile selection ---------------------------------------------------
    itemsize = jnp.dtype(x.dtype).itemsize
    TB = min(_round_up(B, 8), 128)
    # ~4 MiB x-block: with double-buffering + weights + accumulator this stays
    # well inside v7x's smaller scoped-VMEM budget; v5e/v6e have headroom.
    target_block_bytes = 4 * 1024 * 1024
    max_ts = max(8, (target_block_bytes // max(1, TB * D * itemsize)) // 8 * 8)
    TS = max(8, min(_round_up(S, 8), max_ts))

    B_pad = _round_up(B, TB)
    S_pad = _round_up(S, TS)
    NB_pad = _round_up(num_bins, 128)   # lane-dense output stores

    # Zero-pad: padded seq rows add 0 to the sum (we divide by the true S),
    # padded batch rows and bin columns are sliced off after the call.
    if (B_pad, S_pad) != (B, S):
        x = jnp.pad(x, ((0, B_pad - B), (0, S_pad - S), (0, 0)))
    if NB_pad != num_bins:
        w3 = jnp.pad(w3, ((0, 0), (0, NB_pad - num_bins)))
        b3 = jnp.pad(b3, ((0, 0), (0, NB_pad - num_bins)))

    grid = (B_pad // TB, S_pad // TS)

    kernel = functools.partial(
        _classifier_kernel, inv_s=1.0 / float(S), num_bins=num_bins)

    def pinned(arr):
        n = arr.ndim
        return pl.BlockSpec(arr.shape, lambda b, s: (0,) * n)

    flops = 2 * B * (D * 256 + 256 * 128 + 128 * num_bins) + B * S * D
    bytes_accessed = (
        x.size * itemsize
        + sum(int(a.size) * 4 for a in (w1, b1, w2, b2, w3, b3))
        + B_pad * NB_pad * 4)

    out = pl.pallas_call(
        kernel,
        out_shape=jax.ShapeDtypeStruct((B_pad, NB_pad), jnp.float32),
        grid=grid,
        in_specs=[
            pl.BlockSpec((TB, TS, D), lambda b, s: (b, s, 0)),  # streamed x
            pinned(w1), pinned(b1),
            pinned(w2), pinned(b2),
            pinned(w3), pinned(b3),
        ],
        out_specs=pl.BlockSpec((TB, NB_pad), lambda b, s: (b, 0)),
        scratch_shapes=[pltpu.VMEM((TB, D), jnp.float32)],
        compiler_params=pltpu.CompilerParams(
            dimension_semantics=("parallel", "arbitrary")),
        cost_estimate=pl.CostEstimate(
            flops=flops,
            transcendentals=B_pad * NB_pad,
            bytes_accessed=bytes_accessed),
    )(x, w1, b1, w2, b2, w3, b3)

    return out[:B, :num_bins]


def init_params(key, d_embed, num_bins):
    """Deterministic synthetic parameters (shapes from Classifier.__init__)."""
    k1, k2, k3, k4, k5, k6 = jax.random.split(key, 6)

    def lin(kw, kb, fan_in, fan_out):
        bound = 1.0 / jnp.sqrt(fan_in)
        w = jax.random.uniform(kw, (fan_in, fan_out), jnp.float32, -bound, bound)
        b = jax.random.uniform(kb, (1, fan_out), jnp.float32, -bound, bound)
        return w, b

    w1, b1 = lin(k1, k2, d_embed, 256)
    w2, b2 = lin(k3, k4, 256, 128)
    w3, b3 = lin(k5, k6, 128, num_bins)
    return {"w1": w1, "b1": b1, "w2": w2, "b2": b2, "w3": w3, "b3": b3}


def reference_forward(x, params):
    xm = jnp.mean(x.astype(jnp.float32), axis=1)
    h = jnp.maximum(xm @ params["w1"] + params["b1"], 0.0)
    h = jnp.maximum(h @ params["w2"] + params["b2"], 0.0)
    logits = h @ params["w3"] + params["b3"]
    return jax.nn.log_softmax(logits, axis=-1)


if __name__ == "__main__":
    key = jax.random.PRNGKey(0)
    kx, kp = jax.random.split(key)

    B, S, D = 2, 8, 32      # batch, seq, d_embed
    num_bins = 10

    x = jax.random.normal(kx, (B, S, D), dtype=jnp.float32)
    params = init_params(kp, D, num_bins)

    out = classifier_forward(x, params)
    out = jax.block_until_ready(out)

    ref = reference_forward(x, params)
    assert out.shape == (B, num_bins)
    assert jnp.allclose(out, ref, atol=1e-4, rtol=1e-4)

    print("KERNEL_OK")
</pallas_src>

<mosaic_0001>
module attributes {stable_mosaic.version = 11 : i64} {
  func.func @_classifier_kernel(%arg0: i32, %arg1: i32, %arg2: memref<8x8x32xf32, #tpu.memory_space<vmem>>, %arg3: memref<32x256xf32, #tpu.memory_space<vmem>>, %arg4: memref<1x256xf32, #tpu.memory_space<vmem>>, %arg5: memref<256x128xf32, #tpu.memory_space<vmem>>, %arg6: memref<1x128xf32, #tpu.memory_space<vmem>>, %arg7: memref<128x128xf32, #tpu.memory_space<vmem>>, %arg8: memref<1x128xf32, #tpu.memory_space<vmem>>, %arg9: memref<8x128xf32, #tpu.memory_space<vmem>>, %arg10: memref<8x32xf32, #tpu.memory_space<vmem>>) attributes {dimension_semantics = [#tpu.dimension_semantics<parallel>, #tpu.dimension_semantics<arbitrary>], iteration_bounds = array<i64: 1, 1>, scalar_prefetch = 0 : i64, scratch_operands = 1 : i64, tpu.core_type = #tpu.core_type<tc>, window_params = [{transform_indices = @transform_0, window_bounds = array<i64: 8, 8, 32>}, {pipeline_mode = #tpu.pipeline_mode<synchronous>, transform_indices = @transform_1, window_bounds = array<i64: 32, 256>}, {pipeline_mode = #tpu.pipeline_mode<synchronous>, transform_indices = @transform_2, window_bounds = array<i64: 1, 256>}, {pipeline_mode = #tpu.pipeline_mode<synchronous>, transform_indices = @transform_3, window_bounds = array<i64: 256, 128>}, {pipeline_mode = #tpu.pipeline_mode<synchronous>, transform_indices = @transform_4, window_bounds = array<i64: 1, 128>}, {pipeline_mode = #tpu.pipeline_mode<synchronous>, transform_indices = @transform_5, window_bounds = array<i64: 128, 128>}, {pipeline_mode = #tpu.pipeline_mode<synchronous>, transform_indices = @transform_6, window_bounds = array<i64: 1, 128>}, {transform_indices = @transform_7, window_bounds = array<i64: 8, 128>}]} {
    %c0_i32 = arith.constant 0 : i32
    %0 = arith.cmpi eq, %arg1, %c0_i32 : i32
    %1 = arith.extui %0 : i1 to i32
    %c0_i32_0 = arith.constant 0 : i32
    %2 = arith.cmpi ne, %1, %c0_i32_0 : i32
    scf.if %2 {
      %cst_9 = arith.constant 0.000000e+00 : f32
      %11 = vector.broadcast %cst_9 : f32 to vector<8x32xf32>
      %c0_10 = arith.constant 0 : index
      %c0_11 = arith.constant 0 : index
      %12 = vector.load %arg10[%c0_10, %c0_11] : memref<8x32xf32, #tpu.memory_space<vmem>>, vector<8x32xf32>
      tpu.vector_store %arg10[%c0_10, %c0_11], %11 {strides = array<i32>} : memref<8x32xf32, #tpu.memory_space<vmem>>, vector<8x32xf32>,
    } else {
    }
    %c0 = arith.constant 0 : index
    %c0_1 = arith.constant 0 : index
    %c0_2 = arith.constant 0 : index
    %3 = vector.load %arg2[%c0, %c0_1, %c0_2] : memref<8x8x32xf32, #tpu.memory_space<vmem>>, vector<8x8x32xf32>
    %c0_3 = arith.constant 0 : index
    %c0_4 = arith.constant 0 : index
    %4 = vector.load %arg10[%c0_3, %c0_4] : memref<8x32xf32, #tpu.memory_space<vmem>>, vector<8x32xf32>
    %cst = arith.constant dense<0.000000e+00> : vector<8x32xf32>
    %5 = vector.multi_reduction <add>, %3, %cst [1] : vector<8x8x32xf32> to vector<8x32xf32>
    %6 = arith.addf %4, %5 : vector<8x32xf32>
    %c0_5 = arith.constant 0 : index
    %c0_6 = arith.constant 0 : index
    %7 = vector.load %arg10[%c0_5, %c0_6] : memref<8x32xf32, #tpu.memory_space<vmem>>, vector<8x32xf32>
    tpu.vector_store %arg10[%c0_5, %c0_6], %6 {strides = array<i32>} : memref<8x32xf32, #tpu.memory_space<vmem>>, vector<8x32xf32>,
    %c0_i32_7 = arith.constant 0 : i32
    %8 = arith.cmpi eq, %arg1, %c0_i32_7 : i32
    %9 = arith.extui %8 : i1 to i32
    %c0_i32_8 = arith.constant 0 : i32
    %10 = arith.cmpi ne, %9, %c0_i32_8 : i32
    scf.if %10 {
      %c0_9 = arith.constant 0 : index
      %c0_10 = arith.constant 0 : index
      %11 = vector.load %arg10[%c0_9, %c0_10] : memref<8x32xf32, #tpu.memory_space<vmem>>, vector<8x32xf32>
      %cst_11 = arith.constant 1.250000e-01 : f32
      %12 = vector.broadcast %cst_11 : f32 to vector<8x32xf32>
      %13 = arith.mulf %11, %12 : vector<8x32xf32>
      %c0_12 = arith.constant 0 : index
      %c0_13 = arith.constant 0 : index
      %14 = vector.load %arg3[%c0_12, %c0_13] : memref<32x256xf32, #tpu.memory_space<vmem>>, vector<32x256xf32>
      %cst_14 = arith.constant dense<0.000000e+00> : vector<8x256xf32>
      %15 = tpu.matmul %13, %14, %cst_14 {dimension_numbers = #tpu.dot_dimension_numbers<[1], [0], [0], [1], [0, 0, 1, 1], [], []>} : vector<8x32xf32>, vector<32x256xf32>, vector<8x256xf32> -> vector<8x256xf32>
      %c0_15 = arith.constant 0 : index
      %c0_16 = arith.constant 0 : index
      %16 = vector.load %arg4[%c0_15, %c0_16] : memref<1x256xf32, #tpu.memory_space<vmem>>, vector<1x256xf32>
      %17 = vector.broadcast %16 : vector<1x256xf32> to vector<8x256xf32>
      %18 = arith.addf %15, %17 : vector<8x256xf32>
      %cst_17 = arith.constant 0.000000e+00 : f32
      %19 = vector.broadcast %cst_17 : f32 to vector<8x256xf32>
      %20 = arith.maximumf %18, %19 : vector<8x256xf32>
      %c0_18 = arith.constant 0 : index
      %c0_19 = arith.constant 0 : index
      %21 = vector.load %arg5[%c0_18, %c0_19] : memref<256x128xf32, #tpu.memory_space<vmem>>, vector<256x128xf32>
      %cst_20 = arith.constant dense<0.000000e+00> : vector<8x128xf32>
      %22 = tpu.matmul %20, %21, %cst_20 {dimension_numbers = #tpu.dot_dimension_numbers<[1], [0], [0], [1], [0, 0, 1, 1], [], []>} : vector<8x256xf32>, vector<256x128xf32>, vector<8x128xf32> -> vector<8x128xf32>
      %c0_21 = arith.constant 0 : index
      %c0_22 = arith.constant 0 : index
      %23 = vector.load %arg6[%c0_21, %c0_22] : memref<1x128xf32, #tpu.memory_space<vmem>>, vector<1x128xf32>
      %24 = vector.broadcast %23 : vector<1x128xf32> to vector<8x128xf32>
      %25 = arith.addf %22, %24 : vector<8x128xf32>
      %cst_23 = arith.constant 0.000000e+00 : f32
      %26 = vector.broadcast %cst_23 : f32 to vector<8x128xf32>
      %27 = arith.maximumf %25, %26 : vector<8x128xf32>
      %c0_24 = arith.constant 0 : index
      %c0_25 = arith.constant 0 : index
      %28 = vector.load %arg7[%c0_24, %c0_25] : memref<128x128xf32, #tpu.memory_space<vmem>>, vector<128x128xf32>
      %cst_26 = arith.constant dense<0.000000e+00> : vector<8x128xf32>
      %29 = tpu.matmul %27, %28, %cst_26 {dimension_numbers = #tpu.dot_dimension_numbers<[1], [0], [0], [1], [0, 0, 1, 1], [], []>} : vector<8x128xf32>, vector<128x128xf32>, vector<8x128xf32> -> vector<8x128xf32>
      %c0_27 = arith.constant 0 : index
      %c0_28 = arith.constant 0 : index
      %30 = vector.load %arg8[%c0_27, %c0_28] : memref<1x128xf32, #tpu.memory_space<vmem>>, vector<1x128xf32>
      %31 = vector.broadcast %30 : vector<1x128xf32> to vector<8x128xf32>
      %32 = arith.addf %29, %31 : vector<8x128xf32>
      %33 = tpu.iota {dimensions = array<i32: 1>} : vector<8x128xi32>
      %c10_i32 = arith.constant 10 : i32
      %34 = vector.broadcast %c10_i32 : i32 to vector<8x128xi32>
      %35 = arith.cmpi slt, %33, %34 : vector<8x128xi32>
      %cst_29 = arith.constant -1.000000e+30 : f32
      %36 = vector.broadcast %cst_29 : f32 to vector<8x128xf32>
      %37 = arith.select %35, %32, %36 : vector<8x128xi1>, vector<8x128xf32>
      %cst_30 = arith.constant dense<0xFF800000> : vector<8xf32>
      %38 = vector.multi_reduction <maximumf>, %37, %cst_30 [1] : vector<8x128xf32> to vector<8xf32>
      %39 = vector.shape_cast %38 : vector<8xf32> to vector<8x1xf32>
      %40 = vector.broadcast %39 : vector<8x1xf32> to vector<8x128xf32>
      %41 = arith.subf %37, %40 : vector<8x128xf32>
      %42 = math.exp %41 : vector<8x128xf32>
      %cst_31 = arith.constant dense<0.000000e+00> : vector<8xf32>
      %43 = vector.multi_reduction <add>, %42, %cst_31 [1] : vector<8x128xf32> to vector<8xf32>
      %44 = vector.shape_cast %43 : vector<8xf32> to vector<8x1xf32>
      %45 = math.log %44 : vector<8x1xf32>
      %46 = vector.broadcast %45 : vector<8x1xf32> to vector<8x128xf32>
      %47 = arith.subf %41, %46 : vector<8x128xf32>
      %c0_32 = arith.constant 0 : index
      %c0_33 = arith.constant 0 : index
      %48 = vector.load %arg9[%c0_32, %c0_33] : memref<8x128xf32, #tpu.memory_space<vmem>>, vector<8x128xf32>
      tpu.vector_store %arg9[%c0_32, %c0_33], %47 {strides = array<i32>} : memref<8x128xf32, #tpu.memory_space<vmem>>, vector<8x128xf32>,
    } else {
    }
    return
  }
  func.func @transform_0(%arg0: i32, %arg1: i32) -> (i32, i32, i32) {
    %c0_i32 = arith.constant 0 : i32
    %c0_i32_0 = arith.constant 0 : i32
    return %arg0, %arg1, %c0_i32 : i32, i32, i32
  }
  func.func @transform_1(%arg0: i32, %arg1: i32) -> (i32, i32) {
    %c0_i32 = arith.constant 0 : i32
    %c0_i32_0 = arith.constant 0 : i32
    %c0_i32_1 = arith.constant 0 : i32
    return %c0_i32, %c0_i32_0 : i32, i32
  }
  func.func @transform_2(%arg0: i32, %arg1: i32) -> (i32, i32) {
    %c0_i32 = arith.constant 0 : i32
    %c0_i32_0 = arith.constant 0 : i32
    %c0_i32_1 = arith.constant 0 : i32
    return %c0_i32, %c0_i32_0 : i32, i32
  }
  func.func @transform_3(%arg0: i32, %arg1: i32) -> (i32, i32) {
    %c0_i32 = arith.constant 0 : i32
    %c0_i32_0 = arith.constant 0 : i32
    %c0_i32_1 = arith.constant 0 : i32
    return %c0_i32, %c0_i32_0 : i32, i32
  }
  func.func @transform_4(%arg0: i32, %arg1: i32) -> (i32, i32) {
    %c0_i32 = arith.constant 0 : i32
    %c0_i32_0 = arith.constant 0 : i32
    %c0_i32_1 = arith.constant 0 : i32
    return %c0_i32, %c0_i32_0 : i32, i32
  }
  func.func @transform_5(%arg0: i32, %arg1: i32) -> (i32, i32) {
    %c0_i32 = arith.constant 0 : i32
    %c0_i32_0 = arith.constant 0 : i32
    %c0_i32_1 = arith.constant 0 : i32
    return %c0_i32, %c0_i32_0 : i32, i32
  }
  func.func @transform_6(%arg0: i32, %arg1: i32) -> (i32, i32) {
    %c0_i32 = arith.constant 0 : i32
    %c0_i32_0 = arith.constant 0 : i32
    %c0_i32_1 = arith.constant 0 : i32
    return %c0_i32, %c0_i32_0 : i32, i32
  }
  func.func @transform_7(%arg0: i32, %arg1: i32) -> (i32, i32) {
    %c0_i32 = arith.constant 0 : i32
    %c0_i32_0 = arith.constant 0 : i32
    return %arg0, %c0_i32 : i32, i32
  }
}

</mosaic_0001>

<llo_original>
// kernel: tpu_custom_call.1
$region0: #{tpu_custom_call.1}
  #allocation0 [shape = 'u32[]', space=smem, size = 0x4, offset = 0x4, fixed_abs, tag = 'smem constant byte address 0x4 - core index']
  #allocation1 [shape = 'u32[144,128]{1,0:T(1,128)}', space=vmem, size = 0x12000, scoped, tag = 'internal scratch']
  #allocation2 [shape = 'f32[8,32]{1,0:T(8,128)}', space=vmem, size = 0x1000, scoped, tag = 'scratch operand']
  %s0 = inlined_call_operand.hbm [shape: f32[8,8,32], index: 0, kind: input, shape index: {}]
  %s1 = inlined_call_operand.hbm [shape: f32[32,256], index: 1, kind: input, shape index: {}]
  %s2 = inlined_call_operand.vmem [shape: f32[1,256], index: 2, kind: input, shape index: {}]
  %s3 = inlined_call_operand.hbm [shape: f32[256,128], index: 3, kind: input, shape index: {}]
  %s4 = inlined_call_operand.vmem [shape: f32[1,128], index: 4, kind: input, shape index: {}]
  %s5 = inlined_call_operand.hbm [shape: f32[128,128], index: 5, kind: input, shape index: {}]
  %s6 = inlined_call_operand.vmem [shape: f32[1,128], index: 6, kind: input, shape index: {}]
  %s7 = inlined_call_operand.hbm [shape: f32[8,128], index: 7, kind: output, shape index: {}]
  %s8 = sld [smem:[#allocation0]]
  $region62: #{tpu_custom_call.1} parent=0
    _
  %s10 = ssub.s32 1, %s8
  %s11 = scalar_select 0, %s10, %s8
  $region1: #{tpu_custom_call.1} parent=0
    #allocation3 [shape = 'u8[32768]{0}', space=vmem, size = 0x8000, scoped, tag = 'input window, operand 0, single buffered']
    #allocation4 [shape = 's32[1]{0}', space=sflag, size = 0x4, scoped, tag = 'scoped memory for tpu_custom_call.1']
    #allocation5 [shape = 's32[1]{0}', space=sflag, size = 0x4, scoped, tag = 'scoped memory for tpu_custom_call.1']
    #allocation6 [shape = 'u8[32768]{0}', space=vmem, size = 0x8000, scoped, tag = 'input window, operand 1, single buffered']
    #allocation7 [shape = 's32[1]{0}', space=sflag, size = 0x4, scoped, tag = 'scoped memory for tpu_custom_call.1']
    #allocation8 [shape = 'u8[131072]{0}', space=vmem, size = 0x20000, scoped, tag = 'input window, operand 3, single buffered']
    #allocation9 [shape = 'u8[65536]{0}', space=vmem, size = 0x10000, scoped, tag = 'input window, operand 5, single buffered']
    #allocation10 [shape = 's32[1]{0}', space=sflag, size = 0x4, scoped, tag = 'scoped memory for tpu_custom_call.1']
    #allocation11 [shape = 'u8[4096]{0}', space=vmem, size = 0x1000, scoped, tag = 'output window, operand 0, single buffered']
    %12 = vsyncpa [#allocation4], 0
    %13 = vsyncpa [#allocation7], 0
    %14 = vsyncpa [#allocation10], 0
    %15 = vsyncpa [#allocation5], 0
    // Predicated region
    $region2: #{tpu_custom_call.1} parent=1 // pred_check
      _
    $region3: #{tpu_custom_call.1} parent=1 // pred_check_branch
      %17 = sbr.rel (0) target = $region5
    $region4: #{tpu_custom_call.1} parent=1 // pred_region
      %s19 = ssub.s32 1024, 1024
      %20 = vsyncadd [#allocation4], %s19
      %s21 = sshll.u32 [#allocation3], 4
      %s22 = int_to_ptr.vmem [resolvable:$true] %s21
      %27 = dma.hbm_to_vmem [thread:$0]  %s0, 1024, %s22, [#allocation4], 128, 128, 8
    $region5: #{tpu_custom_call.1} parent=1 // pred_fallthru
      _
    // Predicated region
    $region6: #{tpu_custom_call.1} parent=1 // pred_check
      _
    $region7: #{tpu_custom_call.1} parent=1 // pred_check_branch
      %29 = sbr.rel (0) target = $region9
    $region8: #{tpu_custom_call.1} parent=1 // pred_region
      %s31 = ssub.s32 1024, 1024
      %32 = vsyncadd [#allocation7], %s31
      %s33 = sshll.u32 [#allocation6], 4
      %s34 = int_to_ptr.vmem [resolvable:$true] %s33
      %39 = dma.hbm_to_vmem [thread:$0]  %s1, 1024, %s34, [#allocation7], 256, 256, 16
    $region9: #{tpu_custom_call.1} parent=1 // pred_fallthru
      _
    // Predicated region
    $region10: #{tpu_custom_call.1} parent=1 // pred_check
      _
    $region11: #{tpu_custom_call.1} parent=1 // pred_check_branch
      %41 = sbr.rel (0) target = $region13
    $region12: #{tpu_custom_call.1} parent=1 // pred_region
      _
    $region13: #{tpu_custom_call.1} parent=1 // pred_fallthru
      _
    // Predicated region
    $region14: #{tpu_custom_call.1} parent=1 // pred_check
      _
    $region15: #{tpu_custom_call.1} parent=1 // pred_check_branch
      %43 = sbr.rel (0) target = $region17
    $region16: #{tpu_custom_call.1} parent=1 // pred_region
      %s45 = ssub.s32 4096, 4096
      %46 = vsyncadd [#allocation7], %s45
      %s47 = sshll.u32 [#allocation8], 4
      %s48 = int_to_ptr.vmem [resolvable:$true] %s47
      %53 = dma.hbm_to_vmem [thread:$0]  %s3, 4096, %s48, [#allocation7], 128, 128, 8
    $region17: #{tpu_custom_call.1} parent=1 // pred_fallthru
      _
    // Predicated region
    $region18: #{tpu_custom_call.1} parent=1 // pred_check
      _
    $region19: #{tpu_custom_call.1} parent=1 // pred_check_branch
      %55 = sbr.rel (0) target = $region21
    $region20: #{tpu_custom_call.1} parent=1 // pred_region
      _
    $region21: #{tpu_custom_call.1} parent=1 // pred_fallthru
      _
    // Predicated region
    $region22: #{tpu_custom_call.1} parent=1 // pred_check
      _
    $region23: #{tpu_custom_call.1} parent=1 // pred_check_branch
      %57 = sbr.rel (0) target = $region25
    $region24: #{tpu_custom_call.1} parent=1 // pred_region
      %s59 = ssub.s32 2048, 2048
      %60 = vsyncadd [#allocation10], %s59
      %s61 = sshll.u32 [#allocation9], 4
      %s62 = int_to_ptr.vmem [resolvable:$true] %s61
      %67 = dma.hbm_to_vmem [thread:$0]  %s5, 2048, %s62, [#allocation10], 128, 128, 8
    $region25: #{tpu_custom_call.1} parent=1 // pred_fallthru
      _
    // Predicated region
    $region26: #{tpu_custom_call.1} parent=1 // pred_check
      _
    $region27: #{tpu_custom_call.1} parent=1 // pred_check_branch
      %69 = sbr.rel (0) target = $region29
    $region28: #{tpu_custom_call.1} parent=1 // pred_region
      _
    $region29: #{tpu_custom_call.1} parent=1 // pred_fallthru
      _
    // Predicated region
    $region30: #{tpu_custom_call.1} parent=1 // pred_check
      _
    $region31: #{tpu_custom_call.1} parent=1 // pred_check_branch
      %71 = sbr.rel (0) target = $region33
    $region32: #{tpu_custom_call.1} parent=1 // pred_region
      %72 = dma.done [#allocation4], 1024
    $region33: #{tpu_custom_call.1} parent=1 // pred_fallthru
      _
    // Predicated region
    $region34: #{tpu_custom_call.1} parent=1 // pred_check
      _
    $region35: #{tpu_custom_call.1} parent=1 // pred_check_branch
      %74 = sbr.rel (0) target = $region37
    $region36: #{tpu_custom_call.1} parent=1 // pred_region
      %75 = dma.done [#allocation7], 1024
    $region37: #{tpu_custom_call.1} parent=1 // pred_fallthru
      _
    // Predicated region
    $region38: #{tpu_custom_call.1} parent=1 // pred_check
      _
    $region39: #{tpu_custom_call.1} parent=1 // pred_check_branch
      %77 = sbr.rel (0) target = $region41
    $region40: #{tpu_custom_call.1} parent=1 // pred_region
      %78 = dma.done [#allocation7], 4096
    $region41: #{tpu_custom_call.1} parent=1 // pred_fallthru
      _
    // Predicated region
    $region42: #{tpu_custom_call.1} parent=1 // pred_check
      _
    $region43: #{tpu_custom_call.1} parent=1 // pred_check_branch
      %80 = sbr.rel (0) target = $region45
    $region44: #{tpu_custom_call.1} parent=1 // pred_region
      %81 = dma.done [#allocation10], 2048
    $region45: #{tpu_custom_call.1} parent=1 // pred_fallthru
      _
    %p82 = scmp.eq.s32.totalorder 0, 0
    // Predicated region
    $region46: #{tpu_custom_call.1} parent=1 // pred_check
      %p83 = pneg %p82
    $region47: #{tpu_custom_call.1} parent=1 // pred_check_branch
      %85 = sbr.rel (%p83) target = $region49
    $region48: #{tpu_custom_call.1} parent=1 // pred_region
      %vm86 = vcmask 261120
      %87 = vst.msk [vmem:[#allocation2] sm:$0xff] %vm86, 0.0
    $region49: #{tpu_custom_call.1} parent=1 // pred_fallthru
      _
    %v88 = vld [vmem:[#allocation3] sm:$0xff]
    %v89 = vld [vmem:[#allocation3 + $0x8] sm:$0xff]
    %v90 = vld [vmem:[#allocation3 + $0x10] sm:$0xff]
    %v91 = vld [vmem:[#allocation3 + $0x18] sm:$0xff]
    %v92 = vld [vmem:[#allocation3 + $0x20] sm:$0xff]
    %v93 = vld [vmem:[#allocation3 + $0x28] sm:$0xff]
    %v94 = vld [vmem:[#allocation3 + $0x30] sm:$0xff]
    %v95 = vld [vmem:[#allocation3 + $0x38] sm:$0xff]
    %v96 = vld [vmem:[#allocation2] sm:$0xff]
    %vm97 = vcmask 261120
    %v98 = vsel %vm97, %v88, 0.0
    %v99 = vrot.slane %v98, 4
    %v100 = vadd.f32 %v98, %v99
    %v101 = vrot.slane %v100, 2
    %v102 = vadd.f32 %v100, %v101
    %v103 = vrot.slane %v102, 1
    %v104 = vadd.f32 %v102, %v103
    %v105 = vsel %vm97, %v89, 0.0
    %v106 = vrot.slane %v105, 4
    %v107 = vadd.f32 %v105, %v106
    %v108 = vrot.slane %v107, 2
    %v109 = vadd.f32 %v107, %v108
    %v110 = vrot.slane %v109, 1
    %v111 = vadd.f32 %v109, %v110
    %v112 = vsel %vm97, %v90, 0.0
    %v113 = vrot.slane %v112, 4
    %v114 = vadd.f32 %v112, %v113
    %v115 = vrot.slane %v114, 2
    %v116 = vadd.f32 %v114, %v115
    %v117 = vrot.slane %v116, 1
    %v118 = vadd.f32 %v116, %v117
    %v119 = vsel %vm97, %v91, 0.0
    %v120 = vrot.slane %v119, 4
    %v121 = vadd.f32 %v119, %v120
    %v122 = vrot.slane %v121, 2
    %v123 = vadd.f32 %v121, %v122
    %v124 = vrot.slane %v123, 1
    %v125 = vadd.f32 %v123, %v124
    %v126 = vsel %vm97, %v92, 0.0
    %v127 = vrot.slane %v126, 4
    %v128 = vadd.f32 %v126, %v127
    %v129 = vrot.slane %v128, 2
    %v130 = vadd.f32 %v128, %v129
    %v131 = vrot.slane %v130, 1
    %v132 = vadd.f32 %v130, %v131
    %v133 = vsel %vm97, %v93, 0.0
    %v134 = vrot.slane %v133, 4
    %v135 = vadd.f32 %v133, %v134
    %v136 = vrot.slane %v135, 2
    %v137 = vadd.f32 %v135, %v136
    %v138 = vrot.slane %v137, 1
    %v139 = vadd.f32 %v137, %v138
    %v140 = vsel %vm97, %v94, 0.0
    %v141 = vrot.slane %v140, 4
    %v142 = vadd.f32 %v140, %v141
    %v143 = vrot.slane %v142, 2
    %v144 = vadd.f32 %v142, %v143
    %v145 = vrot.slane %v144, 1
    %v146 = vadd.f32 %v144, %v145
    %v147 = vsel %vm97, %v95, 0.0
    %v148 = vrot.slane %v147, 4
    %v149 = vadd.f32 %v147, %v148
    %v150 = vrot.slane %v149, 2
    %v151 = vadd.f32 %v149, %v150
    %v152 = vrot.slane %v151, 1
    %v153 = vadd.f32 %v151, %v152
    %vm162 = vcmask 1041409
    %v163 = vsel %vm162, %v111, %v104
    %vm164 = vcmask 1042434
    %v165 = vsel %vm164, %v118, %v163
    %vm166 = vcmask 1043459
    %v167 = vsel %vm166, %v125, %v165
    %vm168 = vcmask 1044484
    %v169 = vsel %vm168, %v132, %v167
    %vm170 = vcmask 1045509
    %v171 = vsel %vm170, %v139, %v169
    %vm172 = vcmask 1046534
    %v173 = vsel %vm172, %v146, %v171
    %vm174 = vcmask 1047559
    %v175 = vsel %vm174, %v153, %v173
    %v177 = vadd.f32 %v96, %v175
    %178 = vst.msk [vmem:[#allocation2] sm:$0xff] %vm97, %v177
    // Predicated region
    $region50: #{tpu_custom_call.1} parent=1 // pred_check
      %p179 = pneg %p82
    $region51: #{tpu_custom_call.1} parent=1 // pred_check_branch
      %181 = sbr.rel (%p179) target = $region53
    $region52: #{tpu_custom_call.1} parent=1 // pred_region
      %v182 = vld [vmem:[#allocation2] sm:$0xff]
      %v183 = vmul.f32 %v182, 0.125
      %v184 = vld [vmem:[#allocation6] sm:$0xff]
      %v185 = vld [vmem:[#allocation6 + $0x8] sm:$0xff]
      %v186 = vld [vmem:[#allocation6 + $0x10] sm:$0xff]
      %v187 = vld [vmem:[#allocation6 + $0x18] sm:$0xff]
      %v188 = vld [vmem:[#allocation6 + $0x20] sm:$0xff]
      %v189 = vld [vmem:[#allocation6 + $0x28] sm:$0xff]
      %v190 = vld [vmem:[#allocation6 + $0x30] sm:$0xff]
      %v191 = vld [vmem:[#allocation6 + $0x38] sm:$0xff]
      %v192 = vld [vmem:[%s2] sm:$0x3]
      %v194 = vlaneseq
      %v195 = vshrl.u32 %v194, 7
      %v196 = vsub.s32 0, %v195
      %v197 = vrot.slane %v192, %v196
      %v198 = vlaneseq
      %v199 = vshrl.u32 %v198, 7
      %v200 = vsub.s32 1, %v199
      %v201 = vrot.slane %v192, %v200
      %v205 = vsel %vm97, %v183, 0
      %207 = vmatprep.subr.mxu0 0.0
      %208 = vmatpush1.msra.mxu0 0.0
      %209 = vmatprep.subr.mxu0 0.0
      %210 = vmatpush1.msra.mxu0 0.0
      %211 = vmatprep.subr.mxu0 0.0
      %212 = vmatpush1.msra.mxu0 0.0
      %213 = vmatprep.subr.mxu0 0.0
      %214 = vmatpush1.msra.mxu0 0.0
      %215 = vmatprep.subr.mxu0 0.0
      %216 = vmatpush1.msra.mxu0 0.0
      %217 = vmatprep.subr.mxu0 0.0
      %218 = vmatpush1.msra.mxu0 0.0
      %219 = vmatprep.subr.mxu0 0.0
      %220 = vmatpush1.msra.mxu0 0.0
      %221 = vmatprep.subr.mxu0 0.0
      %222 = vmatpush1.msra.mxu0 0.0
      %223 = vmatprep.subr.mxu0 0.0
      %224 = vmatpush1.msra.mxu0 0.0
      %225 = vmatprep.subr.mxu0 0.0
      %226 = vmatpush1.msra.mxu0 0.0
      %227 = vmatprep.subr.mxu0 0.0
      %228 = vmatpush1.msra.mxu0 0.0
      %229 = vmatprep.subr.mxu0 0.0
      %230 = vmatpush1.msra.mxu0 0.0
      %231 = vmatprep.subr.mxu0 %v191
      %232 = vmatpush1.msra.mxu0 %v190
      %233 = vmatprep.subr.mxu0 %v189
      %234 = vmatpush1.msra.mxu0 %v188
      %235 = vmatprep.subr.mxu0 %v187
      %236 = vmatpush1.msra.mxu0 %v186
      %237 = vmatprep.subr.mxu0 %v185
      %238 = vmatpush1.msra.mxu0 %v184
      %239 = vmatprep.subr.mxu0 0.0
      %240 = vmatpush2.msra.mxu0 0.0
      %241 = vmatprep.subr.mxu0 0.0
      %242 = vmatpush2.msra.mxu0 0.0
      %243 = vmatprep.subr.mxu0 0.0
      %244 = vmatpush2.msra.mxu0 0.0
      %245 = vmatprep.subr.mxu0 0.0
      %246 = vmatpush2.msra.mxu0 0.0
      %247 = vmatprep.subr.mxu0 0.0
      %248 = vmatpush2.msra.mxu0 0.0
      %249 = vmatprep.subr.mxu0 0.0
      %250 = vmatpush2.msra.mxu0 0.0
      %251 = vmatprep.subr.mxu0 0.0
      %252 = vmatpush2.msra.mxu0 0.0
      %253 = vmatprep.subr.mxu0 0.0
      %254 = vmatpush2.msra.mxu0 0.0
      %255 = vmatprep.subr.mxu0 0.0
      %256 = vmatpush2.msra.mxu0 0.0
      %257 = vmatprep.subr.mxu0 0.0
      %258 = vmatpush2.msra.mxu0 0.0
      %259 = vmatprep.subr.mxu0 0.0
      %260 = vmatpush2.msra.mxu0 0.0
      %261 = vmatprep.subr.mxu0 0.0
      %262 = vmatpush2.msra.mxu0 0.0
      %263 = vmatprep.subr.mxu0 0.0
      %264 = vmatpush2.msra.mxu0 0.0
      %265 = vmatprep.subr.mxu0 0.0
      %266 = vmatpush2.msra.mxu0 0.0
      %267 = vmatprep.subr.mxu0 0.0
      %268 = vmatpush2.msra.mxu0 0.0
      %269 = vmatprep.subr.mxu0 0.0
      %270 = vmatpush2.msra.mxu0 0.0
      %271 = vmatprep.mubr.f32.mxu0 0.0
      %272 = vmatmul.mubr.f32.gmra.mxu0 %v205
      %v273 = vpop.f32.mrf.mxu0
      %v274 = vadd.f32 %v197, %v273
      %v275 = vpop.f32.mrf.mxu0
      %v276 = vadd.f32 %v201, %v275
      %277 = vdwg.mxu0
      %v278 = vmax.f32 %v274, 0.0
      %v279 = vmax.f32 %v276, 0.0
      %v280 = vld [vmem:[#allocation8] sm:$0xff]
      %v281 = vld [vmem:[#allocation8 + $0x8] sm:$0xff]
      %v282 = vld [vmem:[#allocation8 + $0x10] sm:$0xff]
      %v283 = vld [vmem:[#allocation8 + $0x18] sm:$0xff]
      %v284 = vld [vmem:[#allocation8 + $0x20] sm:$0xff]
      %v285 = vld [vmem:[#allocation8 + $0x28] sm:$0xff]
      %v286 = vld [vmem:[#allocation8 + $0x30] sm:$0xff]
      %v287 = vld [vmem:[#allocation8 + $0x38] sm:$0xff]
      %v288 = vld [vmem:[#allocation8 + $0x40] sm:$0xff]
      %v289 = vld [vmem:[#allocation8 + $0x48] sm:$0xff]
      %v290 = vld [vmem:[#allocation8 + $0x50] sm:$0xff]
      %v291 = vld [vmem:[#allocation8 + $0x58] sm:$0xff]
      %v292 = vld [vmem:[#allocation8 + $0x60] sm:$0xff]
      %v293 = vld [vmem:[#allocation8 + $0x68] sm:$0xff]
      %v294 = vld [vmem:[#allocation8 + $0x70] sm:$0xff]
      %v295 = vld [vmem:[#allocation8 + $0x78] sm:$0xff]
      %v296 = vld [vmem:[#allocation8 + $0x80] sm:$0xff]
      %v297 = vld [vmem:[#allocation8 + $0x88] sm:$0xff]
      %v298 = vld [vmem:[#allocation8 + $0x90] sm:$0xff]
      %v299 = vld [vmem:[#allocation8 + $0x98] sm:$0xff]
      %v300 = vld [vmem:[#allocation8 + $0xa0] sm:$0xff]
      %v301 = vld [vmem:[#allocation8 + $0xa8] sm:$0xff]
      %v302 = vld [vmem:[#allocation8 + $0xb0] sm:$0xff]
      %v303 = vld [vmem:[#allocation8 + $0xb8] sm:$0xff]
      %v304 = vld [vmem:[#allocation8 + $0xc0] sm:$0xff]
      %v305 = vld [vmem:[#allocation8 + $0xc8] sm:$0xff]
      %v306 = vld [vmem:[#allocation8 + $0xd0] sm:$0xff]
      %v307 = vld [vmem:[#allocation8 + $0xd8] sm:$0xff]
      %v308 = vld [vmem:[#allocation8 + $0xe0] sm:$0xff]
      %v309 = vld [vmem:[#allocation8 + $0xe8] sm:$0xff]
      %v310 = vld [vmem:[#allocation8 + $0xf0] sm:$0xff]
      %v311 = vld [vmem:[#allocation8 + $0xf8] sm:$0xff]
      %v312 = vld [vmem:[%s4] sm:$0x1]
      %v314 = vlaneseq
      %v315 = vshrl.u32 %v314, 7
      %v316 = vsub.s32 0, %v315
      %v317 = vrot.slane %v312, %v316
      %319 = vmatprep.subr.mxu0 0.0
      %320 = vmatpush1.msra.mxu0 %v295
      %321 = vmatprep.subr.mxu0 0.0
      %322 = vmatpush1.msra.mxu0 %v294
      %323 = vmatprep.subr.mxu0 0.0
      %324 = vmatpush1.msra.mxu0 %v293
      %325 = vmatprep.subr.mxu0 0.0
      %326 = vmatpush1.msra.mxu0 %v292
      %327 = vmatprep.subr.mxu0 0.0
      %328 = vmatpush1.msra.mxu0 %v291
      %329 = vmatprep.subr.mxu0 0.0
      %330 = vmatpush1.msra.mxu0 %v290
      %331 = vmatprep.subr.mxu0 0.0
      %332 = vmatpush1.msra.mxu0 %v289
      %333 = vmatprep.subr.mxu0 0.0
      %334 = vmatpush1.msra.mxu0 %v288
      %335 = vmatprep.subr.mxu0 0.0
      %336 = vmatpush1.msra.mxu0 %v287
      %337 = vmatprep.subr.mxu0 0.0
      %338 = vmatpush1.msra.mxu0 %v286
      %339 = vmatprep.subr.mxu0 0.0
      %340 = vmatpush1.msra.mxu0 %v285
      %341 = vmatprep.subr.mxu0 0.0
      %342 = vmatpush1.msra.mxu0 %v284
      %343 = vmatprep.subr.mxu0 0.0
      %344 = vmatpush1.msra.mxu0 %v283
      %345 = vmatprep.subr.mxu0 0.0
      %346 = vmatpush1.msra.mxu0 %v282
      %347 = vmatprep.subr.mxu0 0.0
      %348 = vmatpush1.msra.mxu0 %v281
      %349 = vmatprep.subr.mxu0 0.0
      %350 = vmatpush1.msra.mxu0 %v280
      %351 = vmatprep.subr.mxu0 0.0
      %352 = vmatpush2.msra.mxu0 %v311
      %353 = vmatprep.subr.mxu0 0.0
      %354 = vmatpush2.msra.mxu0 %v310
      %355 = vmatprep.subr.mxu0 0.0
      %356 = vmatpush2.msra.mxu0 %v309
      %357 = vmatprep.subr.mxu0 0.0
      %358 = vmatpush2.msra.mxu0 %v308
      %359 = vmatprep.subr.mxu0 0.0
      %360 = vmatpush2.msra.mxu0 %v307
      %361 = vmatprep.subr.mxu0 0.0
      %362 = vmatpush2.msra.mxu0 %v306
      %363 = vmatprep.subr.mxu0 0.0
      %364 = vmatpush2.msra.mxu0 %v305
      %365 = vmatprep.subr.mxu0 0.0
      %366 = vmatpush2.msra.mxu0 %v304
      %367 = vmatprep.subr.mxu0 0.0
      %368 = vmatpush2.msra.mxu0 %v303
      %369 = vmatprep.subr.mxu0 0.0
      %370 = vmatpush2.msra.mxu0 %v302
      %371 = vmatprep.subr.mxu0 0.0
      %372 = vmatpush2.msra.mxu0 %v301
      %373 = vmatprep.subr.mxu0 0.0
      %374 = vmatpush2.msra.mxu0 %v300
      %375 = vmatprep.subr.mxu0 0.0
      %376 = vmatpush2.msra.mxu0 %v299
      %377 = vmatprep.subr.mxu0 0.0
      %378 = vmatpush2.msra.mxu0 %v298
      %379 = vmatprep.subr.mxu0 0.0
      %380 = vmatpush2.msra.mxu0 %v297
      %381 = vmatprep.subr.mxu0 0.0
      %382 = vmatpush2.msra.mxu0 %v296
      %383 = vmatprep.mubr.f32.mxu0 %v279
      %384 = vmatmul.mubr.f32.gmra.mxu0 %v278
      %v385 = vpop.f32.mrf.mxu0
      %v386 = vadd.f32 %v317, %v385
      %v387 = vpop.f32.mrf.mxu0
      %388 = vdwg.mxu0
      %v389 = vmax.f32 %v386, 0.0
      %v390 = vld [vmem:[#allocation9] sm:$0xff]
      %v391 = vld [vmem:[#allocation9 + $0x8] sm:$0xff]
      %v392 = vld [vmem:[#allocation9 + $0x10] sm:$0xff]
      %v393 = vld [vmem:[#allocation9 + $0x18] sm:$0xff]
      %v394 = vld [vmem:[#allocation9 + $0x20] sm:$0xff]
      %v395 = vld [vmem:[#allocation9 + $0x28] sm:$0xff]
      %v396 = vld [vmem:[#allocation9 + $0x30] sm:$0xff]
      %v397 = vld [vmem:[#allocation9 + $0x38] sm:$0xff]
      %v398 = vld [vmem:[#allocation9 + $0x40] sm:$0xff]
      %v399 = vld [vmem:[#allocation9 + $0x48] sm:$0xff]
      %v400 = vld [vmem:[#allocation9 + $0x50] sm:$0xff]
      %v401 = vld [vmem:[#allocation9 + $0x58] sm:$0xff]
      %v402 = vld [vmem:[#allocation9 + $0x60] sm:$0xff]
      %v403 = vld [vmem:[#allocation9 + $0x68] sm:$0xff]
      %v404 = vld [vmem:[#allocation9 + $0x70] sm:$0xff]
      %v405 = vld [vmem:[#allocation9 + $0x78] sm:$0xff]
      %v406 = vld [vmem:[%s6] sm:$0x1]
      %v408 = vlaneseq
      %v409 = vshrl.u32 %v408, 7
      %v410 = vsub.s32 0, %v409
      %v411 = vrot.slane %v406, %v410
      %413 = vmatprep.subr.mxu0 0.0
      %414 = vmatpush1.msra.mxu0 %v405
      %415 = vmatprep.subr.mxu0 0.0
      %416 = vmatpush1.msra.mxu0 %v404
      %417 = vmatprep.subr.mxu0 0.0
      %418 = vmatpush1.msra.mxu0 %v403
      %419 = vmatprep.subr.mxu0 0.0
      %420 = vmatpush1.msra.mxu0 %v402
      %421 = vmatprep.subr.mxu0 0.0
      %422 = vmatpush1.msra.mxu0 %v401
      %423 = vmatprep.subr.mxu0 0.0
      %424 = vmatpush1.msra.mxu0 %v400
      %425 = vmatprep.subr.mxu0 0.0
      %426 = vmatpush1.msra.mxu0 %v399
      %427 = vmatprep.subr.mxu0 0.0
      %428 = vmatpush1.msra.mxu0 %v398
      %429 = vmatprep.subr.mxu0 0.0
      %430 = vmatpush1.msra.mxu0 %v397
      %431 = vmatprep.subr.mxu0 0.0
      %432 = vmatpush1.msra.mxu0 %v396
      %433 = vmatprep.subr.mxu0 0.0
      %434 = vmatpush1.msra.mxu0 %v395
      %435 = vmatprep.subr.mxu0 0.0
      %436 = vmatpush1.msra.mxu0 %v394
      %437 = vmatprep.subr.mxu0 0.0
      %438 = vmatpush1.msra.mxu0 %v393
      %439 = vmatprep.subr.mxu0 0.0
      %440 = vmatpush1.msra.mxu0 %v392
      %441 = vmatprep.subr.mxu0 0.0
      %442 = vmatpush1.msra.mxu0 %v391
      %443 = vmatprep.subr.mxu0 0.0
      %444 = vmatpush1.msra.mxu0 %v390
      %445 = vmatprep.subr.mxu0 0.0
      %446 = vmatpush2.msra.mxu0 0.0
      %447 = vmatprep.subr.mxu0 0.0
      %448 = vmatpush2.msra.mxu0 0.0
      %449 = vmatprep.subr.mxu0 0.0
      %450 = vmatpush2.msra.mxu0 0.0
      %451 = vmatprep.subr.mxu0 0.0
      %452 = vmatpush2.msra.mxu0 0.0
      %453 = vmatprep.subr.mxu0 0.0
      %454 = vmatpush2.msra.mxu0 0.0
      %455 = vmatprep.subr.mxu0 0.0
      %456 = vmatpush2.msra.mxu0 0.0
      %457 = vmatprep.subr.mxu0 0.0
      %458 = vmatpush2.msra.mxu0 0.0
      %459 = vmatprep.subr.mxu0 0.0
      %460 = vmatpush2.msra.mxu0 0.0
      %461 = vmatprep.subr.mxu0 0.0
      %462 = vmatpush2.msra.mxu0 0.0
      %463 = vmatprep.subr.mxu0 0.0
      %464 = vmatpush2.msra.mxu0 0.0
      %465 = vmatprep.subr.mxu0 0.0
      %466 = vmatpush2.msra.mxu0 0.0
      %467 = vmatprep.subr.mxu0 0.0
      %468 = vmatpush2.msra.mxu0 0.0
      %469 = vmatprep.subr.mxu0 0.0
      %470 = vmatpush2.msra.mxu0 0.0
      %471 = vmatprep.subr.mxu0 0.0
      %472 = vmatpush2.msra.mxu0 0.0
      %473 = vmatprep.subr.mxu0 0.0
      %474 = vmatpush2.msra.mxu0 0.0
      %475 = vmatprep.subr.mxu0 0.0
      %476 = vmatpush2.msra.mxu0 0.0
      %477 = vmatprep.mubr.f32.mxu0 0.0
      %478 = vmatmul.mubr.f32.gmra.mxu0 %v389
      %v479 = vpop.f32.mrf.mxu0
      %v480 = vadd.f32 %v411, %v479
      %v481 = vpop.f32.mrf.mxu0
      %482 = vdwg.mxu0
      %v483 = vlaneseq
      %v484 = vand.u32 %v483, 127
      %vm485 = vcmp.lt.s32.totalorder %v484, 10
      %v486 = vsel %vm485, %v480, -1e+30
      %487 = vmax.xlane.f32.xlu0 %v486
      %v488 = vpop.xlane.xlu0 %487
      %v489 = vsub.f32 %v486, %v488
      %v490 = vmul.f32 %v489, 1.442695
      %v491 = vpow.pop %v490
      %492 = vadd.xlane.f32.xlu0 %v491
      %v493 = vpop.xlane.xlu0 %492
      %v494 = vlog2.pop %v493
      %v495 = vmul.f32 %v494, 0.6931472
      %v496 = vsub.f32 %v489, %v495
      %497 = vst [vmem:[#allocation11] sm:$0xff] %v496
    $region53: #{tpu_custom_call.1} parent=1 // pred_fallthru
      _
    // Predicated region
    $region54: #{tpu_custom_call.1} parent=1 // pred_check
      _
    $region55: #{tpu_custom_call.1} parent=1 // pred_check_branch
      %499 = sbr.rel (0) target = $region57
    $region56: #{tpu_custom_call.1} parent=1 // pred_region
      %s501 = ssub.s32 128, 128
      %502 = vsyncadd [#allocation5], %s501
      %s504 = sshll.u32 [#allocation11], 4
      %s505 = int_to_ptr.vmem [resolvable:$true] %s504
      %507 = dma.vmem_to_hbm [thread:$0]  %s505, 128, %s7, [#allocation5]
    $region57: #{tpu_custom_call.1} parent=1 // pred_fallthru
      _
    // Predicated region
    $region58: #{tpu_custom_call.1} parent=1 // pred_check
      _
    $region59: #{tpu_custom_call.1} parent=1 // pred_check_branch
      %509 = sbr.rel (0) target = $region61
    $region60: #{tpu_custom_call.1} parent=1 // pred_region
      %510 = dma.done [#allocation5], 128
    $region61: #{tpu_custom_call.1} parent=1 // pred_fallthru
      _
    %511 = vsyncpa [#allocation4], 1
    %512 = vsyncpa [#allocation7], 1
    %513 = vsyncpa [#allocation10], 1
    %514 = vsyncpa [#allocation5], 1

</llo_original>
